<compile_context>
chip_gen: v5e
topology: v5e:2x2
jax: 0.10.0
libtpu: 0.0.40
codegen_flags: <defaults>
</compile_context>

<pallas_src>
import math
import functools

import jax
import jax.numpy as jnp
from jax import lax
from jax.experimental import pallas as pl
from jax.experimental.pallas import tpu as pltpu

BN_EPS = 1e-5      # nn.BatchNorm1d default eps
NORM_EPS = 1e-12   # F.normalize default eps
LANE = 128
NEG_INF = -1e30


def _round_up(n, m):
    return ((n + m - 1) // m) * m


# --------------------------------------------------------------------------
# Kernel (grid over class tiles):
#   [j==0] Dropout(p=0) -> Linear -> BatchNorm1d(train) -> F.normalize  (scratch)
#   per tile: cosine tile -> target-only ArcFace margin -> logits tile store
#             -> online LSE / target-logit accumulation
#   [last]  CrossEntropyLoss(mean)
# --------------------------------------------------------------------------
def _kfashion_kernel(pooled_ref, fcw_ref, fcb_ref, gamma_ref, beta_ref,
                     arcw_ref, winv_ref, label_ref,
                     logits_ref, loss_ref,
                     fn_sc, m_sc, l_sc, tgt_sc,
                     *, n_classes, class_tile, scale, cos_m, sin_m, th, mm):
    j = pl.program_id(0)

    # ---- extract_feat (runs once; normalized feature kept resident in VMEM) ----
    @pl.when(j == 0)
    def _():
        # fc: pooled @ W^T + b  (bf16 MXU operands, f32 accumulate)
        y = jnp.dot(pooled_ref[...].astype(jnp.bfloat16), fcw_ref[...],
                    preferred_element_type=jnp.float32) + fcb_ref[...]      # [B, Fp]
        # BatchNorm1d training-mode forward (biased batch stats), gamma folded
        # into the rsqrt scale.
        mu = jnp.mean(y, axis=0, keepdims=True)
        d = y - mu
        var = jnp.mean(d * d, axis=0, keepdims=True)
        feat = d * (gamma_ref[...] * lax.rsqrt(var + BN_EPS)) + beta_ref[...]
        # F.normalize(x) = x * rsqrt(max(||x||^2, eps^2)), sums in f32
        inv = lax.rsqrt(jnp.maximum(
            jnp.sum(feat * feat, axis=-1, keepdims=True), NORM_EPS * NORM_EPS))
        fn_sc[...] = (feat * inv).astype(jnp.bfloat16)
        # online-LSE accumulator init
        m_sc[...] = jnp.full_like(m_sc, NEG_INF)
        l_sc[...] = jnp.zeros_like(l_sc)
        tgt_sc[...] = jnp.zeros_like(tgt_sc)

    # ---- ArcMarginProduct on this class tile ----
    # raw = fn @ arc_w^T on the MXU; per-class inverse norms applied as a
    # [1, TNC] column scale (no normalized-weight materialization).
    raw = lax.dot_general(fn_sc[...], arcw_ref[...], (((1,), (1,)), ((), ())),
                          preferred_element_type=jnp.float32)               # [B, TNC]
    cosine = jnp.clip(raw * winv_ref[...], -1.0, 1.0)

    gid = j * class_tile + lax.broadcasted_iota(jnp.int32, cosine.shape, 1)  # global class id
    one_hot = (gid == label_ref[...]).astype(jnp.float32)                    # scatter_(1, label, 1)

    # margin only for the target class ([B,1] work instead of [B,NC])
    cos_t = jnp.sum(one_hot * cosine, axis=-1, keepdims=True)                # [B, 1]
    sin_t = jnp.sqrt(jnp.maximum(1.0 - cos_t * cos_t, 0.0))
    phi_t = cos_t * cos_m - sin_t * sin_m
    phi_t = jnp.where(cos_t > th, phi_t, cos_t - mm)                         # easy_margin=False

    logits = scale * cosine + one_hot * (scale * (phi_t - cos_t))            # [B, TNC]
    logits_ref[...] = logits                                                 # lane-dense store

    # ---- online LSE across class tiles (padded columns masked out) ----
    masked = jnp.where(gid < n_classes, logits, NEG_INF)
    m_new = jnp.maximum(m_sc[...], jnp.max(masked, axis=-1, keepdims=True))
    l_sc[...] = (jnp.exp(m_sc[...] - m_new) * l_sc[...]
                 + jnp.sum(jnp.exp(masked - m_new), axis=-1, keepdims=True))
    m_sc[...] = m_new
    tgt_sc[...] = tgt_sc[...] + jnp.sum(one_hot * logits, axis=-1, keepdims=True)

    @pl.when(j == pl.num_programs(0) - 1)
    def _():
        # nn.CrossEntropyLoss() with mean reduction
        loss_ref[0] = jnp.mean(m_sc[...] + jnp.log(l_sc[...]) - tgt_sc[...])


# --------------------------------------------------------------------------
# One-time parameter layout prep (outside the jitted hot path):
#  - fc weight transposed to [C, Fp] bf16, arc weight padded to [NCp, Fp] bf16
#  - per-class inverse norms precomputed in f32 (refresh per optimizer step)
# --------------------------------------------------------------------------
def prepare_params(params, class_tile=128):
    fc_w = jnp.asarray(params["fc_w"], jnp.float32)       # [FC_DIM, C]
    arc_w = jnp.asarray(params["arc_w"], jnp.float32)     # [NC, FC_DIM]
    fc_dim, c = fc_w.shape
    n_classes = arc_w.shape[0]
    fp = _round_up(fc_dim, LANE)
    ncp = _round_up(n_classes, class_tile)

    fc_w_t = jnp.zeros((c, fp), jnp.bfloat16).at[:, :fc_dim].set(
        fc_w.T.astype(jnp.bfloat16))
    fc_b = jnp.zeros((1, fp), jnp.float32).at[:, :fc_dim].set(params["fc_b"])
    gamma = jnp.zeros((1, fp), jnp.float32).at[:, :fc_dim].set(params["bn_gamma"])
    beta = jnp.zeros((1, fp), jnp.float32).at[:, :fc_dim].set(params["bn_beta"])
    arc_w_p = jnp.zeros((ncp, fp), jnp.bfloat16).at[:n_classes, :fc_dim].set(
        arc_w.astype(jnp.bfloat16))
    # F.normalize(weight): per-class inverse norms in f32; padded rows -> 0 so
    # padded cosine columns are exactly 0 (and masked in the LSE anyway).
    winv = lax.rsqrt(jnp.maximum(jnp.sum(arc_w * arc_w, axis=1),
                                 NORM_EPS * NORM_EPS))
    arc_winv = jnp.zeros((1, ncp), jnp.float32).at[0, :n_classes].set(winv)
    return {"fc_w_t": fc_w_t, "fc_b": fc_b, "bn_gamma": gamma, "bn_beta": beta,
            "arc_w": arc_w_p, "arc_winv": arc_winv}


# --------------------------------------------------------------------------
# Wrapper: KfashionModel.forward(image, label) for typ == 'train'
# --------------------------------------------------------------------------
def kfashion_forward(x_nchw, label, prep, *, n_classes, class_tile=128,
                     scale=30.0, margin=0.5):
    B = x_nchw.shape[0]
    # AdaptiveAvgPool2d(1).view(B,-1): plain XLA reduction over (H, W) -- no
    # NCHW->NHWC transpose HBM pass, only the pooled [B, C] enters the kernel.
    pooled = jnp.mean(x_nchw.astype(jnp.float32), axis=(2, 3))              # [B, C]
    C = pooled.shape[1]
    fp = prep["fc_w_t"].shape[1]
    ncp = prep["arc_w"].shape[0]
    n_tiles = ncp // class_tile

    cos_m = math.cos(margin)
    sin_m = math.sin(margin)
    th = math.cos(math.pi - margin)
    mm = math.sin(math.pi - margin) * margin

    kernel = functools.partial(
        _kfashion_kernel, n_classes=n_classes, class_tile=class_tile,
        scale=scale, cos_m=cos_m, sin_m=sin_m, th=th, mm=mm)

    logits_p, loss = pl.pallas_call(
        kernel,
        grid=(n_tiles,),
        out_shape=(jax.ShapeDtypeStruct((B, ncp), jnp.float32),
                   jax.ShapeDtypeStruct((1,), jnp.float32)),
        in_specs=[
            pl.BlockSpec((B, C), lambda j: (0, 0)),            # pooled
            pl.BlockSpec((C, fp), lambda j: (0, 0)),           # fc_w_t (bf16)
            pl.BlockSpec((1, fp), lambda j: (0, 0)),           # fc_b
            pl.BlockSpec((1, fp), lambda j: (0, 0)),           # bn gamma
            pl.BlockSpec((1, fp), lambda j: (0, 0)),           # bn beta
            pl.BlockSpec((class_tile, fp), lambda j: (j, 0)),  # arc_w tile (bf16)
            pl.BlockSpec((1, class_tile), lambda j: (0, j)),   # per-class inv norms
            pl.BlockSpec((B, 1), lambda j: (0, 0)),            # label
        ],
        out_specs=(
            pl.BlockSpec((B, class_tile), lambda j: (0, j)),   # logits tile
            pl.BlockSpec((1,), lambda j: (0,),
                         memory_space=pltpu.MemorySpace.SMEM), # scalar loss
        ),
        scratch_shapes=[
            pltpu.VMEM((B, fp), jnp.bfloat16),                 # normalized feature
            pltpu.VMEM((B, 1), jnp.float32),                   # running max
            pltpu.VMEM((B, 1), jnp.float32),                   # running sum
            pltpu.VMEM((B, 1), jnp.float32),                   # target logit
        ],
        compiler_params=pltpu.CompilerParams(
            dimension_semantics=("arbitrary",),                # class axis carries LSE
            vmem_limit_bytes=32 * 1024 * 1024),
    )(pooled, prep["fc_w_t"], prep["fc_b"], prep["bn_gamma"], prep["bn_beta"],
      prep["arc_w"], prep["arc_winv"], label.reshape(B, 1).astype(jnp.int32))

    return logits_p[:, :n_classes], loss[0]


# --------------------------------------------------------------------------
# Deterministic parameter init (mirrors KfashionModel.__init__ / _init_params)
# --------------------------------------------------------------------------
def init_params(key, final_in_features, fc_dim, n_classes):
    k1, k2 = jax.random.split(key)
    # nn.init.xavier_normal_(fc.weight) -- shape [fc_dim, in_features]
    std = math.sqrt(2.0 / (final_in_features + fc_dim))
    fc_w = std * jax.random.normal(k1, (fc_dim, final_in_features), jnp.float32)
    fc_b = jnp.zeros((fc_dim,), jnp.float32)            # constant_(bias, 0)
    bn_gamma = jnp.ones((fc_dim,), jnp.float32)         # constant_(bn.weight, 1)
    bn_beta = jnp.zeros((fc_dim,), jnp.float32)         # constant_(bn.bias, 0)
    # nn.init.xavier_uniform_(ArcMargin.weight) -- shape [out_features, in_features]
    limit = math.sqrt(6.0 / (fc_dim + n_classes))
    arc_w = jax.random.uniform(k2, (n_classes, fc_dim), jnp.float32,
                               minval=-limit, maxval=limit)
    return {"fc_w": fc_w, "fc_b": fc_b, "bn_gamma": bn_gamma,
            "bn_beta": bn_beta, "arc_w": arc_w}


if __name__ == "__main__":
    B, C, H, W = 8, 128, 8, 8       # backbone feature map (final_in_features = 128)
    FC_DIM = 64                     # opt.FC_DIM
    N_CLASSES = 200                 # opt.CLASSES (pads to 256 -> 2 class tiles)
    CLASS_TILE = 128                # raise (e.g. 1024) for production NC/Fp

    key = jax.random.PRNGKey(0)
    kx, kl, kp = jax.random.split(key, 3)
    x = jax.random.normal(kx, (B, C, H, W), jnp.float32)
    label = jax.random.randint(kl, (B,), 0, N_CLASSES, jnp.int32)
    params = init_params(kp, C, FC_DIM, N_CLASSES)
    prep = prepare_params(params, class_tile=CLASS_TILE)   # one-time layout prep

    fwd = jax.jit(functools.partial(kfashion_forward, n_classes=N_CLASSES,
                                    class_tile=CLASS_TILE, scale=30.0, margin=0.5))
    logits, loss = fwd(x, label, prep)
    jax.block_until_ready((logits, loss))

    assert logits.shape == (B, N_CLASSES)
    assert loss.shape == ()
    print("KERNEL_OK")
</pallas_src>

<mosaic_0001>
module attributes {stable_mosaic.version = 11 : i64} {
  func.func @_kfashion_kernel(%arg0: i32, %arg1: memref<8x128xf32, #tpu.memory_space<vmem>>, %arg2: memref<128x128xbf16, #tpu.memory_space<vmem>>, %arg3: memref<1x128xf32, #tpu.memory_space<vmem>>, %arg4: memref<1x128xf32, #tpu.memory_space<vmem>>, %arg5: memref<1x128xf32, #tpu.memory_space<vmem>>, %arg6: memref<128x128xbf16, #tpu.memory_space<vmem>>, %arg7: memref<1x128xf32, #tpu.memory_space<vmem>>, %arg8: memref<8x1xi32, #tpu.memory_space<vmem>>, %arg9: memref<8x128xf32, #tpu.memory_space<vmem>>, %arg10: memref<1xf32, #tpu.memory_space<smem>>, %arg11: memref<8x128xbf16, #tpu.memory_space<vmem>>, %arg12: memref<8x1xf32, #tpu.memory_space<vmem>>, %arg13: memref<8x1xf32, #tpu.memory_space<vmem>>, %arg14: memref<8x1xf32, #tpu.memory_space<vmem>>) attributes {dimension_semantics = [#tpu.dimension_semantics<arbitrary>], iteration_bounds = array<i64: 2>, scalar_prefetch = 0 : i64, scratch_operands = 4 : i64, tpu.core_type = #tpu.core_type<tc>, window_params = [{pipeline_mode = #tpu.pipeline_mode<synchronous>, transform_indices = @transform_0, window_bounds = array<i64: 8, 128>}, {pipeline_mode = #tpu.pipeline_mode<synchronous>, transform_indices = @transform_1, window_bounds = array<i64: 128, 128>}, {pipeline_mode = #tpu.pipeline_mode<synchronous>, transform_indices = @transform_2, window_bounds = array<i64: 1, 128>}, {pipeline_mode = #tpu.pipeline_mode<synchronous>, transform_indices = @transform_3, window_bounds = array<i64: 1, 128>}, {pipeline_mode = #tpu.pipeline_mode<synchronous>, transform_indices = @transform_4, window_bounds = array<i64: 1, 128>}, {transform_indices = @transform_5, window_bounds = array<i64: 128, 128>}, {transform_indices = @transform_6, window_bounds = array<i64: 1, 128>}, {pipeline_mode = #tpu.pipeline_mode<synchronous>, transform_indices = @transform_7, window_bounds = array<i64: 8, 1>}, {transform_indices = @transform_8, window_bounds = array<i64: 8, 128>}, {transform_indices = @transform_9, window_bounds = array<i64: 1>}]} {
    %c0_i32 = arith.constant 0 : i32
    %0 = arith.cmpi eq, %arg0, %c0_i32 : i32
    %1 = arith.extui %0 : i1 to i32
    %c0_i32_0 = arith.constant 0 : i32
    %2 = arith.cmpi ne, %1, %c0_i32_0 : i32
    scf.if %2 {
      %c0_40 = arith.constant 0 : index
      %c0_41 = arith.constant 0 : index
      %80 = vector.load %arg1[%c0_40, %c0_41] : memref<8x128xf32, #tpu.memory_space<vmem>>, vector<8x128xf32>
      %81 = arith.truncf %80 : vector<8x128xf32> to vector<8x128xbf16>
      %c0_42 = arith.constant 0 : index
      %c0_43 = arith.constant 0 : index
      %82 = vector.load %arg2[%c0_42, %c0_43] : memref<128x128xbf16, #tpu.memory_space<vmem>>, vector<128x128xbf16>
      %cst_44 = arith.constant dense<0.000000e+00> : vector<8x128xf32>
      %83 = tpu.matmul %81, %82, %cst_44 {dimension_numbers = #tpu.dot_dimension_numbers<[1], [0], [0], [1], [0, 0, 1, 1], [], []>} : vector<8x128xbf16>, vector<128x128xbf16>, vector<8x128xf32> -> vector<8x128xf32>
      %c0_45 = arith.constant 0 : index
      %c0_46 = arith.constant 0 : index
      %84 = vector.load %arg3[%c0_45, %c0_46] : memref<1x128xf32, #tpu.memory_space<vmem>>, vector<1x128xf32>
      %85 = vector.broadcast %84 : vector<1x128xf32> to vector<8x128xf32>
      %86 = arith.addf %83, %85 : vector<8x128xf32>
      %cst_47 = arith.constant dense<0.000000e+00> : vector<128xf32>
      %87 = vector.multi_reduction <add>, %86, %cst_47 [0] : vector<8x128xf32> to vector<128xf32>
      %88 = vector.shape_cast %87 : vector<128xf32> to vector<1x128xf32>
      %cst_48 = arith.constant 8.000000e+00 : f32
      %89 = vector.broadcast %cst_48 : f32 to vector<1x128xf32>
      %90 = arith.divf %88, %89 : vector<1x128xf32>
      %91 = vector.broadcast %90 : vector<1x128xf32> to vector<8x128xf32>
      %92 = arith.subf %86, %91 : vector<8x128xf32>
      %93 = arith.mulf %92, %92 : vector<8x128xf32>
      %cst_49 = arith.constant dense<0.000000e+00> : vector<128xf32>
      %94 = vector.multi_reduction <add>, %93, %cst_49 [0] : vector<8x128xf32> to vector<128xf32>
      %95 = vector.shape_cast %94 : vector<128xf32> to vector<1x128xf32>
      %cst_50 = arith.constant 8.000000e+00 : f32
      %96 = vector.broadcast %cst_50 : f32 to vector<1x128xf32>
      %97 = arith.divf %95, %96 : vector<1x128xf32>
      %c0_51 = arith.constant 0 : index
      %c0_52 = arith.constant 0 : index
      %98 = vector.load %arg4[%c0_51, %c0_52] : memref<1x128xf32, #tpu.memory_space<vmem>>, vector<1x128xf32>
      %cst_53 = arith.constant 9.99999974E-6 : f32
      %99 = vector.broadcast %cst_53 : f32 to vector<1x128xf32>
      %100 = arith.addf %97, %99 : vector<1x128xf32>
      %101 = math.rsqrt %100 : vector<1x128xf32>
      %102 = arith.mulf %98, %101 : vector<1x128xf32>
      %103 = vector.broadcast %102 : vector<1x128xf32> to vector<8x128xf32>
      %104 = arith.mulf %92, %103 : vector<8x128xf32>
      %c0_54 = arith.constant 0 : index
      %c0_55 = arith.constant 0 : index
      %105 = vector.load %arg5[%c0_54, %c0_55] : memref<1x128xf32, #tpu.memory_space<vmem>>, vector<1x128xf32>
      %106 = vector.broadcast %105 : vector<1x128xf32> to vector<8x128xf32>
      %107 = arith.addf %104, %106 : vector<8x128xf32>
      %108 = arith.mulf %107, %107 : vector<8x128xf32>
      %cst_56 = arith.constant dense<0.000000e+00> : vector<8xf32>
      %109 = vector.multi_reduction <add>, %108, %cst_56 [1] : vector<8x128xf32> to vector<8xf32>
      %110 = vector.shape_cast %109 : vector<8xf32> to vector<8x1xf32>
      %cst_57 = arith.constant 1.000000e-24 : f32
      %111 = vector.broadcast %cst_57 : f32 to vector<8x1xf32>
      %112 = arith.maximumf %110, %111 : vector<8x1xf32>
      %113 = math.rsqrt %112 : vector<8x1xf32>
      %114 = vector.broadcast %113 : vector<8x1xf32> to vector<8x128xf32>
      %115 = arith.mulf %107, %114 : vector<8x128xf32>
      %116 = arith.truncf %115 : vector<8x128xf32> to vector<8x128xbf16>
      %c0_58 = arith.constant 0 : index
      %c0_59 = arith.constant 0 : index
      %117 = vector.load %arg11[%c0_58, %c0_59] : memref<8x128xbf16, #tpu.memory_space<vmem>>, vector<8x128xbf16>
      tpu.vector_store %arg11[%c0_58, %c0_59], %116 {strides = array<i32>} : memref<8x128xbf16, #tpu.memory_space<vmem>>, vector<8x128xbf16>,
      %cst_60 = arith.constant -1.000000e+30 : f32
      %118 = vector.broadcast %cst_60 : f32 to vector<8x1xf32>
      %c0_61 = arith.constant 0 : index
      %c0_62 = arith.constant 0 : index
      %119 = vector.load %arg12[%c0_61, %c0_62] : memref<8x1xf32, #tpu.memory_space<vmem>>, vector<8x1xf32>
      tpu.vector_store %arg12[%c0_61, %c0_62], %118 {strides = array<i32>} : memref<8x1xf32, #tpu.memory_space<vmem>>, vector<8x1xf32>,
      %cst_63 = arith.constant 0.000000e+00 : f32
      %120 = vector.broadcast %cst_63 : f32 to vector<8x1xf32>
      %c0_64 = arith.constant 0 : index
      %c0_65 = arith.constant 0 : index
      %121 = vector.load %arg13[%c0_64, %c0_65] : memref<8x1xf32, #tpu.memory_space<vmem>>, vector<8x1xf32>
      tpu.vector_store %arg13[%c0_64, %c0_65], %120 {strides = array<i32>} : memref<8x1xf32, #tpu.memory_space<vmem>>, vector<8x1xf32>,
      %cst_66 = arith.constant 0.000000e+00 : f32
      %122 = vector.broadcast %cst_66 : f32 to vector<8x1xf32>
      %c0_67 = arith.constant 0 : index
      %c0_68 = arith.constant 0 : index
      %123 = vector.load %arg14[%c0_67, %c0_68] : memref<8x1xf32, #tpu.memory_space<vmem>>, vector<8x1xf32>
      tpu.vector_store %arg14[%c0_67, %c0_68], %122 {strides = array<i32>} : memref<8x1xf32, #tpu.memory_space<vmem>>, vector<8x1xf32>,
    } else {
    }
    %c0 = arith.constant 0 : index
    %c0_1 = arith.constant 0 : index
    %3 = vector.load %arg11[%c0, %c0_1] : memref<8x128xbf16, #tpu.memory_space<vmem>>, vector<8x128xbf16>
    %c0_2 = arith.constant 0 : index
    %c0_3 = arith.constant 0 : index
    %4 = vector.load %arg6[%c0_2, %c0_3] : memref<128x128xbf16, #tpu.memory_space<vmem>>, vector<128x128xbf16>
    %cst = arith.constant dense<0.000000e+00> : vector<8x128xf32>
    %5 = tpu.matmul %3, %4, %cst {dimension_numbers = #tpu.dot_dimension_numbers<[1], [1], [0], [0], [0, 0, 1, 0], [], []>} : vector<8x128xbf16>, vector<128x128xbf16>, vector<8x128xf32> -> vector<8x128xf32>
    %c0_4 = arith.constant 0 : index
    %c0_5 = arith.constant 0 : index
    %6 = vector.load %arg7[%c0_4, %c0_5] : memref<1x128xf32, #tpu.memory_space<vmem>>, vector<1x128xf32>
    %7 = vector.broadcast %6 : vector<1x128xf32> to vector<8x128xf32>
    %8 = arith.mulf %5, %7 : vector<8x128xf32>
    %cst_6 = arith.constant -1.000000e+00 : f32
    %cst_7 = arith.constant 1.000000e+00 : f32
    %9 = vector.broadcast %cst_6 : f32 to vector<8x128xf32>
    %10 = arith.maximumf %9, %8 : vector<8x128xf32>
    %11 = vector.broadcast %cst_7 : f32 to vector<8x128xf32>
    %12 = arith.minimumf %11, %10 : vector<8x128xf32>
    %c128_i32 = arith.constant 128 : i32
    %13 = arith.muli %arg0, %c128_i32 : i32
    %14 = tpu.iota {dimensions = array<i32: 1>} : vector<8x128xi32>
    %15 = vector.broadcast %13 : i32 to vector<8x128xi32>
    %16 = arith.addi %15, %14 : vector<8x128xi32>
    %c0_8 = arith.constant 0 : index
    %c0_9 = arith.constant 0 : index
    %17 = vector.load %arg8[%c0_8, %c0_9] : memref<8x1xi32, #tpu.memory_space<vmem>>, vector<8x1xi32>
    %18 = vector.broadcast %17 : vector<8x1xi32> to vector<8x128xi32>
    %19 = arith.cmpi eq, %16, %18 : vector<8x128xi32>
    %20 = arith.extui %19 : vector<8x128xi1> to vector<8x128xi32>
    %21 = arith.sitofp %20 : vector<8x128xi32> to vector<8x128xf32>
    %22 = arith.mulf %21, %12 : vector<8x128xf32>
    %cst_10 = arith.constant dense<0.000000e+00> : vector<8xf32>
    %23 = vector.multi_reduction <add>, %22, %cst_10 [1] : vector<8x128xf32> to vector<8xf32>
    %24 = vector.shape_cast %23 : vector<8xf32> to vector<8x1xf32>
    %25 = arith.mulf %24, %24 : vector<8x1xf32>
    %cst_11 = arith.constant 1.000000e+00 : f32
    %26 = vector.broadcast %cst_11 : f32 to vector<8x1xf32>
    %27 = arith.subf %26, %25 : vector<8x1xf32>
    %cst_12 = arith.constant 0.000000e+00 : f32
    %28 = vector.broadcast %cst_12 : f32 to vector<8x1xf32>
    %29 = arith.maximumf %27, %28 : vector<8x1xf32>
    %30 = math.sqrt %29 : vector<8x1xf32>
    %cst_13 = arith.constant 0.87758255 : f32
    %31 = vector.broadcast %cst_13 : f32 to vector<8x1xf32>
    %32 = arith.mulf %24, %31 : vector<8x1xf32>
    %cst_14 = arith.constant 0.47942555 : f32
    %33 = vector.broadcast %cst_14 : f32 to vector<8x1xf32>
    %34 = arith.mulf %30, %33 : vector<8x1xf32>
    %35 = arith.subf %32, %34 : vector<8x1xf32>
    %cst_15 = arith.constant -0.87758255 : f32
    %36 = vector.broadcast %cst_15 : f32 to vector<8x1xf32>
    %37 = arith.cmpf ogt, %24, %36 : vector<8x1xf32>
    %cst_16 = arith.constant 0.239712775 : f32
    %38 = vector.broadcast %cst_16 : f32 to vector<8x1xf32>
    %39 = arith.subf %24, %38 : vector<8x1xf32>
    %40 = arith.select %37, %35, %39 : vector<8x1xi1>, vector<8x1xf32>
    %cst_17 = arith.constant 3.000000e+01 : f32
    %41 = vector.broadcast %cst_17 : f32 to vector<8x128xf32>
    %42 = arith.mulf %41, %12 : vector<8x128xf32>
    %43 = arith.subf %40, %24 : vector<8x1xf32>
    %cst_18 = arith.constant 3.000000e+01 : f32
    %44 = vector.broadcast %cst_18 : f32 to vector<8x1xf32>
    %45 = arith.mulf %44, %43 : vector<8x1xf32>
    %46 = vector.broadcast %45 : vector<8x1xf32> to vector<8x128xf32>
    %47 = arith.mulf %21, %46 : vector<8x128xf32>
    %48 = arith.addf %42, %47 : vector<8x128xf32>
    %c0_19 = arith.constant 0 : index
    %c0_20 = arith.constant 0 : index
    %49 = vector.load %arg9[%c0_19, %c0_20] : memref<8x128xf32, #tpu.memory_space<vmem>>, vector<8x128xf32>
    tpu.vector_store %arg9[%c0_19, %c0_20], %48 {strides = array<i32>} : memref<8x128xf32, #tpu.memory_space<vmem>>, vector<8x128xf32>,
    %c200_i32 = arith.constant 200 : i32
    %50 = vector.broadcast %c200_i32 : i32 to vector<8x128xi32>
    %51 = arith.cmpi slt, %16, %50 : vector<8x128xi32>
    %cst_21 = arith.constant -1.000000e+30 : f32
    %52 = vector.broadcast %cst_21 : f32 to vector<8x128xf32>
    %53 = arith.select %51, %48, %52 : vector<8x128xi1>, vector<8x128xf32>
    %c0_22 = arith.constant 0 : index
    %c0_23 = arith.constant 0 : index
    %54 = vector.load %arg12[%c0_22, %c0_23] : memref<8x1xf32, #tpu.memory_space<vmem>>, vector<8x1xf32>
    %cst_24 = arith.constant dense<0xFF800000> : vector<8xf32>
    %55 = vector.multi_reduction <maximumf>, %53, %cst_24 [1] : vector<8x128xf32> to vector<8xf32>
    %56 = vector.shape_cast %55 : vector<8xf32> to vector<8x1xf32>
    %57 = arith.maximumf %54, %56 : vector<8x1xf32>
    %c0_25 = arith.constant 0 : index
    %c0_26 = arith.constant 0 : index
    %58 = vector.load %arg12[%c0_25, %c0_26] : memref<8x1xf32, #tpu.memory_space<vmem>>, vector<8x1xf32>
    %59 = arith.subf %58, %57 : vector<8x1xf32>
    %60 = math.exp %59 : vector<8x1xf32>
    %c0_27 = arith.constant 0 : index
    %c0_28 = arith.constant 0 : index
    %61 = vector.load %arg13[%c0_27, %c0_28] : memref<8x1xf32, #tpu.memory_space<vmem>>, vector<8x1xf32>
    %62 = arith.mulf %60, %61 : vector<8x1xf32>
    %63 = vector.broadcast %57 : vector<8x1xf32> to vector<8x128xf32>
    %64 = arith.subf %53, %63 : vector<8x128xf32>
    %65 = math.exp %64 : vector<8x128xf32>
    %cst_29 = arith.constant dense<0.000000e+00> : vector<8xf32>
    %66 = vector.multi_reduction <add>, %65, %cst_29 [1] : vector<8x128xf32> to vector<8xf32>
    %67 = vector.shape_cast %66 : vector<8xf32> to vector<8x1xf32>
    %68 = arith.addf %62, %67 : vector<8x1xf32>
    %c0_30 = arith.constant 0 : index
    %c0_31 = arith.constant 0 : index
    %69 = vector.load %arg13[%c0_30, %c0_31] : memref<8x1xf32, #tpu.memory_space<vmem>>, vector<8x1xf32>
    tpu.vector_store %arg13[%c0_30, %c0_31], %68 {strides = array<i32>} : memref<8x1xf32, #tpu.memory_space<vmem>>, vector<8x1xf32>,
    %c0_32 = arith.constant 0 : index
    %c0_33 = arith.constant 0 : index
    %70 = vector.load %arg12[%c0_32, %c0_33] : memref<8x1xf32, #tpu.memory_space<vmem>>, vector<8x1xf32>
    tpu.vector_store %arg12[%c0_32, %c0_33], %57 {strides = array<i32>} : memref<8x1xf32, #tpu.memory_space<vmem>>, vector<8x1xf32>,
    %c0_34 = arith.constant 0 : index
    %c0_35 = arith.constant 0 : index
    %71 = vector.load %arg14[%c0_34, %c0_35] : memref<8x1xf32, #tpu.memory_space<vmem>>, vector<8x1xf32>
    %72 = arith.mulf %21, %48 : vector<8x128xf32>
    %cst_36 = arith.constant dense<0.000000e+00> : vector<8xf32>
    %73 = vector.multi_reduction <add>, %72, %cst_36 [1] : vector<8x128xf32> to vector<8xf32>
    %74 = vector.shape_cast %73 : vector<8xf32> to vector<8x1xf32>
    %75 = arith.addf %71, %74 : vector<8x1xf32>
    %c0_37 = arith.constant 0 : index
    %c0_38 = arith.constant 0 : index
    %76 = vector.load %arg14[%c0_37, %c0_38] : memref<8x1xf32, #tpu.memory_space<vmem>>, vector<8x1xf32>
    tpu.vector_store %arg14[%c0_37, %c0_38], %75 {strides = array<i32>} : memref<8x1xf32, #tpu.memory_space<vmem>>, vector<8x1xf32>,
    %c1_i32 = arith.constant 1 : i32
    %77 = arith.cmpi eq, %arg0, %c1_i32 : i32
    %78 = arith.extui %77 : i1 to i32
    %c0_i32_39 = arith.constant 0 : i32
    %79 = arith.cmpi ne, %78, %c0_i32_39 : i32
    scf.if %79 {
      %c0_40 = arith.constant 0 : index
      %c0_41 = arith.constant 0 : index
      %80 = vector.load %arg12[%c0_40, %c0_41] : memref<8x1xf32, #tpu.memory_space<vmem>>, vector<8x1xf32>
      %c0_42 = arith.constant 0 : index
      %c0_43 = arith.constant 0 : index
      %81 = vector.load %arg13[%c0_42, %c0_43] : memref<8x1xf32, #tpu.memory_space<vmem>>, vector<8x1xf32>
      %82 = math.log %81 : vector<8x1xf32>
      %83 = arith.addf %80, %82 : vector<8x1xf32>
      %c0_44 = arith.constant 0 : index
      %c0_45 = arith.constant 0 : index
      %84 = vector.load %arg14[%c0_44, %c0_45] : memref<8x1xf32, #tpu.memory_space<vmem>>, vector<8x1xf32>
      %85 = arith.subf %83, %84 : vector<8x1xf32>
      %86 = vector.shape_cast %85 : vector<8x1xf32> to vector<1x8x1xf32>
      %cst_46 = arith.constant dense<0.000000e+00> : vector<1xf32>
      %87 = vector.multi_reduction <add>, %86, %cst_46 [1, 2] : vector<1x8x1xf32> to vector<1xf32>
      %88 = vector.shape_cast %87 : vector<1xf32> to vector<1x1x1xf32>
      %89 = vector.extract %88[0, 0, 0] : f32 from vector<1x1x1xf32>
      %cst_47 = arith.constant 8.000000e+00 : f32
      %90 = arith.divf %89, %cst_47 : f32
      %c0_48 = arith.constant 0 : index
      %91 = memref.load %arg10[%c0_48] : memref<1xf32, #tpu.memory_space<smem>>
      memref.store %90, %arg10[%c0_48] : memref<1xf32, #tpu.memory_space<smem>>
    } else {
    }
    return
  }
  func.func @transform_0(%arg0: i32) -> (i32, i32) {
    %c0_i32 = arith.constant 0 : i32
    %c0_i32_0 = arith.constant 0 : i32
    %c0_i32_1 = arith.constant 0 : i32
    return %c0_i32, %c0_i32_0 : i32, i32
  }
  func.func @transform_1(%arg0: i32) -> (i32, i32) {
    %c0_i32 = arith.constant 0 : i32
    %c0_i32_0 = arith.constant 0 : i32
    %c0_i32_1 = arith.constant 0 : i32
    return %c0_i32, %c0_i32_0 : i32, i32
  }
  func.func @transform_2(%arg0: i32) -> (i32, i32) {
    %c0_i32 = arith.constant 0 : i32
    %c0_i32_0 = arith.constant 0 : i32
    %c0_i32_1 = arith.constant 0 : i32
    return %c0_i32, %c0_i32_0 : i32, i32
  }
  func.func @transform_3(%arg0: i32) -> (i32, i32) {
    %c0_i32 = arith.constant 0 : i32
    %c0_i32_0 = arith.constant 0 : i32
    %c0_i32_1 = arith.constant 0 : i32
    return %c0_i32, %c0_i32_0 : i32, i32
  }
  func.func @transform_4(%arg0: i32) -> (i32, i32) {
    %c0_i32 = arith.constant 0 : i32
    %c0_i32_0 = arith.constant 0 : i32
    %c0_i32_1 = arith.constant 0 : i32
    return %c0_i32, %c0_i32_0 : i32, i32
  }
  func.func @transform_5(%arg0: i32) -> (i32, i32) {
    %c0_i32 = arith.constant 0 : i32
    %c0_i32_0 = arith.constant 0 : i32
    return %arg0, %c0_i32 : i32, i32
  }
  func.func @transform_6(%arg0: i32) -> (i32, i32) {
    %c0_i32 = arith.constant 0 : i32
    %c0_i32_0 = arith.constant 0 : i32
    return %c0_i32, %arg0 : i32, i32
  }
  func.func @transform_7(%arg0: i32) -> (i32, i32) {
    %c0_i32 = arith.constant 0 : i32
    %c0_i32_0 = arith.constant 0 : i32
    %c0_i32_1 = arith.constant 0 : i32
    return %c0_i32, %c0_i32_0 : i32, i32
  }
  func.func @transform_8(%arg0: i32) -> (i32, i32) {
    %c0_i32 = arith.constant 0 : i32
    %c0_i32_0 = arith.constant 0 : i32
    return %c0_i32, %arg0 : i32, i32
  }
  func.func @transform_9(%arg0: i32) -> i32 {
    %c0_i32 = arith.constant 0 : i32
    %c0_i32_0 = arith.constant 0 : i32
    return %c0_i32 : i32
  }
}

</mosaic_0001>

<llo_original>
// kernel: kfashion_forward.1
$region0: #{kfashion_forward.1}
  #allocation0 [shape = 'u32[]', space=smem, size = 0x4, offset = 0x4, fixed_abs, tag = 'smem constant byte address 0x4 - core index']
  #allocation1 [shape = 'u32[72,128]{1,0:T(1,128)}', space=vmem, size = 0x9000, scoped, tag = 'internal scratch']
  #allocation2 [shape = 'bf16[8,128]{1,0:T(8,128)(2,1)}', space=vmem, size = 0x800, scoped, tag = 'scratch operand']
  #allocation3 [shape = 'f32[8,1]{1,0:T(8,128)}', space=vmem, size = 0x1000, scoped, tag = 'scratch operand']
  #allocation4 [shape = 'f32[8,1]{1,0:T(8,128)}', space=vmem, size = 0x1000, scoped, tag = 'scratch operand']
  #allocation5 [shape = 'f32[8,1]{1,0:T(8,128)}', space=vmem, size = 0x1000, scoped, tag = 'scratch operand']
  %s0 = inlined_call_operand.vmem [shape: f32[8,128], index: 0, kind: input, shape index: {}]
  %s1 = inlined_call_operand.vmem [shape: bf16[128,128], index: 1, kind: input, shape index: {}]
  %s2 = inlined_call_operand.vmem [shape: f32[1,128], index: 2, kind: input, shape index: {}]
  %s3 = inlined_call_operand.vmem [shape: f32[1,128], index: 3, kind: input, shape index: {}]
  %s4 = inlined_call_operand.vmem [shape: f32[1,128], index: 4, kind: input, shape index: {}]
  %s5 = inlined_call_operand.vmem [shape: bf16[256,128], index: 5, kind: input, shape index: {}]
  %s6 = inlined_call_operand.vmem [shape: f32[1,256], index: 6, kind: input, shape index: {}]
  %s7 = inlined_call_operand.vmem [shape: s32[8,1], index: 7, kind: input, shape index: {}]
  %s8 = inlined_call_operand.hbm [shape: f32[8,256], index: 8, kind: output, shape index: {0}]
  %s9 = inlined_call_operand.hbm [shape: f32[1], index: 9, kind: output, shape index: {1}]
  %10 = xla_tuple %s8, %s9
  %s11 = sld [smem:[#allocation0]]
  $region81: #{kfashion_forward.1} parent=0
    _
  %s13 = ssub.s32 1, %s11
  %s14 = scalar_select 0, %s13, %s11
  $region1: #{kfashion_forward.1} parent=0
    #allocation6 [shape = 'u8[8192]{0}', space=vmem, size = 0x2000, scoped, tag = 'output window, operand 0']
    #allocation7 [shape = 's32[2]{0}', space=sflag, size = 0x8, scoped, tag = 'scoped memory for kfashion_forward.1']
    #allocation8 [shape = 's32[2]{0}', space=sflag, size = 0x8, scoped, tag = 'scoped memory for kfashion_forward.1']
    #allocation9 [shape = 'u8[512]{0}', space=smem, size = 0x200, scoped, tag = 'output window, operand 1, single buffered']
    %15 = vsyncpa [#allocation7], 0
    %s16 = scalar_lea.sflag [#allocation7], 1
    %17 = vsyncpa %s16, 0
    %18 = vsyncpa [#allocation8], 0
    loop: start=0, step=1, limit=4
    $region2: #{kfashion_forward.1} parent=1 // loop_pre_header
      _
    $region3: #{kfashion_forward.1} parent=1 // loop_header
      %s20 = sphi 0, %s24
      %p21 = scmp.ge.s32.totalorder %s20, 4
      %s28 = sphi 0, %s28
      %s30 = sphi 0, %s28
      %s31 = sphi 0, %s30
      %s45 = sphi 0, %s31
      %s49 = sphi 0, %s49
      %s51 = sphi 0, %s49
      %s52 = sphi 0, %s51
      %s66 = sphi 0, %s52
      %s70 = sphi 0, %s70
      %s72 = sphi 0, %s70
      %s73 = sphi 0, %s72
      %s87 = sphi 0, %s73
      %s91 = sphi 0, %s91
      %s93 = sphi 0, %s91
      %s94 = sphi 0, %s93
      %s108 = sphi 0, %s94
      %s112 = sphi 0, %s112
      %s114 = sphi 0, %s112
      %s115 = sphi 0, %s114
      %s129 = sphi 0, %s115
      %s135 = sphi 0, %s137
      %s138 = sphi 0, %s135
      %s139 = sphi 0, %s138
      %s155 = sphi 0, %s139
      %s161 = sphi 0, %s163
      %s164 = sphi 0, %s161
      %s165 = sphi 0, %s164
      %s181 = sphi 0, %s165
      %s185 = sphi 0, %s185
      %s187 = sphi 0, %s185
      %s188 = sphi 0, %s187
      %s202 = sphi 0, %s188
      %s208 = sphi 0, %s210
      %s211 = sphi 0, %s208
      %s212 = sphi 0, %s211
      %s228 = sphi 0, %s212
      %s232 = sphi 0, %s232
      %s234 = sphi 0, %s232
      %s235 = sphi 0, %s234
      %s249 = sphi 0, %s235
    $region4: #{kfashion_forward.1} parent=1 // loop_header_branch
      %23 = sbr.rel (%p21) target = $region8
    $region5: #{kfashion_forward.1} parent=1 // loop_body
      %s25 = ssub.s32 %s20, 1
      %s26 = ssub.s32 %s20, 2
      %s27 = sadd.s32 %s20, 1
      %s29 = sadd.s32 %s28, 1
      %p32 = scmp.eq.s32.totalorder %s20, 1
      %p33 = scmp.ne.s32.totalorder %s28, %s30
      %p34 = scmp.eq.s32.totalorder %s20, 0
      %p35 = por %p33, %p34
      %p36 = scmp.ne.s32.totalorder %s28, %s30
      %p37 = scmp.eq.s32.totalorder %s25, 1
      %p38 = por %p36, %p37
      %p39 = scmp.ne.s32.totalorder %s30, %s31
      %p40 = scmp.eq.s32.totalorder %s25, 0
      %p41 = por %p39, %p40
      %p42 = scmp.ne.s32.totalorder %s30, %s31
      %p43 = scmp.eq.s32.totalorder %s26, 1
      %p44 = por %p42, %p43
      %p46 = scmp.ne.s32.totalorder %s31, %s45
      %p47 = scmp.eq.s32.totalorder %s26, 0
      %p48 = por %p46, %p47
      %s50 = sadd.s32 %s49, 1
      %p53 = scmp.eq.s32.totalorder %s20, 1
      %p54 = scmp.ne.s32.totalorder %s49, %s51
      %p55 = scmp.eq.s32.totalorder %s20, 0
      %p56 = por %p54, %p55
      %p57 = scmp.ne.s32.totalorder %s49, %s51
      %p58 = scmp.eq.s32.totalorder %s25, 1
      %p59 = por %p57, %p58
      %p60 = scmp.ne.s32.totalorder %s51, %s52
      %p61 = scmp.eq.s32.totalorder %s25, 0
      %p62 = por %p60, %p61
      %p63 = scmp.ne.s32.totalorder %s51, %s52
      %p64 = scmp.eq.s32.totalorder %s26, 1
      %p65 = por %p63, %p64
      %p67 = scmp.ne.s32.totalorder %s52, %s66
      %p68 = scmp.eq.s32.totalorder %s26, 0
      %p69 = por %p67, %p68
      %s71 = sadd.s32 %s70, 1
      %p74 = scmp.eq.s32.totalorder %s20, 1
      %p75 = scmp.ne.s32.totalorder %s70, %s72
      %p76 = scmp.eq.s32.totalorder %s20, 0
      %p77 = por %p75, %p76
      %p78 = scmp.ne.s32.totalorder %s70, %s72
      %p79 = scmp.eq.s32.totalorder %s25, 1
      %p80 = por %p78, %p79
      %p81 = scmp.ne.s32.totalorder %s72, %s73
      %p82 = scmp.eq.s32.totalorder %s25, 0
      %p83 = por %p81, %p82
      %p84 = scmp.ne.s32.totalorder %s72, %s73
      %p85 = scmp.eq.s32.totalorder %s26, 1
      %p86 = por %p84, %p85
      %p88 = scmp.ne.s32.totalorder %s73, %s87
      %p89 = scmp.eq.s32.totalorder %s26, 0
      %p90 = por %p88, %p89
      %s92 = sadd.s32 %s91, 1
      %p95 = scmp.eq.s32.totalorder %s20, 1
      %p96 = scmp.ne.s32.totalorder %s91, %s93
      %p97 = scmp.eq.s32.totalorder %s20, 0
      %p98 = por %p96, %p97
      %p99 = scmp.ne.s32.totalorder %s91, %s93
      %p100 = scmp.eq.s32.totalorder %s25, 1
      %p101 = por %p99, %p100
      %p102 = scmp.ne.s32.totalorder %s93, %s94
      %p103 = scmp.eq.s32.totalorder %s25, 0
      %p104 = por %p102, %p103
      %p105 = scmp.ne.s32.totalorder %s93, %s94
      %p106 = scmp.eq.s32.totalorder %s26, 1
      %p107 = por %p105, %p106
      %p109 = scmp.ne.s32.totalorder %s94, %s108
      %p110 = scmp.eq.s32.totalorder %s26, 0
      %p111 = por %p109, %p110
      %s113 = sadd.s32 %s112, 1
      %p116 = scmp.eq.s32.totalorder %s20, 1
      %p117 = scmp.ne.s32.totalorder %s112, %s114
      %p118 = scmp.eq.s32.totalorder %s20, 0
      %p119 = por %p117, %p118
      %p120 = scmp.ne.s32.totalorder %s112, %s114
      %p121 = scmp.eq.s32.totalorder %s25, 1
      %p122 = por %p120, %p121
      %p123 = scmp.ne.s32.totalorder %s114, %s115
      %p124 = scmp.eq.s32.totalorder %s25, 0
      %p125 = por %p123, %p124
      %p126 = scmp.ne.s32.totalorder %s114, %s115
      %p127 = scmp.eq.s32.totalorder %s26, 1
      %p128 = por %p126, %p127
      %p130 = scmp.ne.s32.totalorder %s115, %s129
      %p131 = scmp.eq.s32.totalorder %s26, 0
      %p132 = por %p130, %p131
      %s133 = ssub.s32 %s20, %s27
      %p134 = scmp.eq.s32.totalorder %s133, 0
      %s136 = sadd.s32 %s135, 1
      %s137 = scalar_select %p134, %s135, %s136
      %p140 = pneg %p134
      %p141 = scmp.eq.s32.totalorder %s20, 1
      %p142 = por %p140, %p141
      %p143 = scmp.ne.s32.totalorder %s135, %s138
      %p144 = scmp.eq.s32.totalorder %s20, 0
      %p145 = por %p143, %p144
      %p146 = scmp.ne.s32.totalorder %s135, %s138
      %p147 = scmp.eq.s32.totalorder %s25, 1
      %p148 = por %p146, %p147
      %p149 = scmp.ne.s32.totalorder %s138, %s139
      %p150 = scmp.eq.s32.totalorder %s25, 0
      %p151 = por %p149, %p150
      %p152 = scmp.ne.s32.totalorder %s138, %s139
      %p153 = scmp.eq.s32.totalorder %s26, 1
      %p154 = por %p152, %p153
      %p156 = scmp.ne.s32.totalorder %s139, %s155
      %p157 = scmp.eq.s32.totalorder %s26, 0
      %p158 = por %p156, %p157
      %s159 = ssub.s32 %s20, %s27
      %p160 = scmp.eq.s32.totalorder %s159, 0
      %s162 = sadd.s32 %s161, 1
      %s163 = scalar_select %p160, %s161, %s162
      %p166 = pneg %p160
      %p167 = scmp.eq.s32.totalorder %s20, 1
      %p168 = por %p166, %p167
      %p169 = scmp.ne.s32.totalorder %s161, %s164
      %p170 = scmp.eq.s32.totalorder %s20, 0
      %p171 = por %p169, %p170
      %p172 = scmp.ne.s32.totalorder %s161, %s164
      %p173 = scmp.eq.s32.totalorder %s25, 1
      %p174 = por %p172, %p173
      %p175 = scmp.ne.s32.totalorder %s164, %s165
      %p176 = scmp.eq.s32.totalorder %s25, 0
      %p177 = por %p175, %p176
      %p178 = scmp.ne.s32.totalorder %s164, %s165
      %p179 = scmp.eq.s32.totalorder %s26, 1
      %p180 = por %p178, %p179
      %p182 = scmp.ne.s32.totalorder %s165, %s181
      %p183 = scmp.eq.s32.totalorder %s26, 0
      %p184 = por %p182, %p183
      %s186 = sadd.s32 %s185, 1
      %p189 = scmp.eq.s32.totalorder %s20, 1
      %p190 = scmp.ne.s32.totalorder %s185, %s187
      %p191 = scmp.eq.s32.totalorder %s20, 0
      %p192 = por %p190, %p191
      %p193 = scmp.ne.s32.totalorder %s185, %s187
      %p194 = scmp.eq.s32.totalorder %s25, 1
      %p195 = por %p193, %p194
      %p196 = scmp.ne.s32.totalorder %s187, %s188
      %p197 = scmp.eq.s32.totalorder %s25, 0
      %p198 = por %p196, %p197
      %p199 = scmp.ne.s32.totalorder %s187, %s188
      %p200 = scmp.eq.s32.totalorder %s26, 1
      %p201 = por %p199, %p200
      %p203 = scmp.ne.s32.totalorder %s188, %s202
      %p204 = scmp.eq.s32.totalorder %s26, 0
      %p205 = por %p203, %p204
      %s206 = ssub.s32 %s20, %s27
      %p207 = scmp.eq.s32.totalorder %s206, 0
      %s209 = sadd.s32 %s208, 1
      %s210 = scalar_select %p207, %s208, %s209
      %p213 = pneg %p207
      %p214 = scmp.eq.s32.totalorder %s20, 1
      %p215 = por %p213, %p214
      %p216 = scmp.ne.s32.totalorder %s208, %s211
      %p217 = scmp.eq.s32.totalorder %s20, 0
      %p218 = por %p216, %p217
      %p219 = scmp.ne.s32.totalorder %s208, %s211
      %p220 = scmp.eq.s32.totalorder %s25, 1
      %p221 = por %p219, %p220
      %p222 = scmp.ne.s32.totalorder %s211, %s212
      %p223 = scmp.eq.s32.totalorder %s25, 0
      %p224 = por %p222, %p223
      %p225 = scmp.ne.s32.totalorder %s211, %s212
      %p226 = scmp.eq.s32.totalorder %s26, 1
      %p227 = por %p225, %p226
      %p229 = scmp.ne.s32.totalorder %s212, %s228
      %p230 = scmp.eq.s32.totalorder %s26, 0
      %p231 = por %p229, %p230
      %s233 = sadd.s32 %s232, 1
      %p236 = scmp.eq.s32.totalorder %s20, 1
      %p237 = scmp.ne.s32.totalorder %s232, %s234
      %p238 = scmp.eq.s32.totalorder %s20, 0
      %p239 = por %p237, %p238
      %p240 = scmp.ne.s32.totalorder %s232, %s234
      %p241 = scmp.eq.s32.totalorder %s25, 1
      %p242 = por %p240, %p241
      %p243 = scmp.ne.s32.totalorder %s234, %s235
      %p244 = scmp.eq.s32.totalorder %s25, 0
      %p245 = por %p243, %p244
      %p246 = scmp.ne.s32.totalorder %s234, %s235
      %p247 = scmp.eq.s32.totalorder %s26, 1
      %p248 = por %p246, %p247
      %p250 = scmp.ne.s32.totalorder %s235, %s249
      %p251 = scmp.eq.s32.totalorder %s26, 0
      %p252 = por %p250, %p251
      %p253 = scmp.le.s32.totalorder 1, %s20
      %p254 = scmp.lt.s32.totalorder %s20, 3
      %p255 = pnand %p253, %p254
      %p256 = pneg %p255
      // Predicated region
      $region9: #{kfashion_forward.1} parent=5 // pred_check
        _
      $region10: #{kfashion_forward.1} parent=5 // pred_check_branch
        %258 = sbr.rel (%p255) target = $region12
      $region11: #{kfashion_forward.1} parent=5 // pred_region
        %s259 = ssub.s32 %s20, 1
        // Predicated region
        $region13: #{kfashion_forward.1} parent=11 // pred_check
          %p260 = pneg %p41
        $region14: #{kfashion_forward.1} parent=11 // pred_check_branch
          %262 = sbr.rel (%p260) target = $region16
        $region15: #{kfashion_forward.1} parent=11 // pred_region
          _
        $region16: #{kfashion_forward.1} parent=11 // pred_fallthru
          _
        // Predicated region
        $region17: #{kfashion_forward.1} parent=11 // pred_check
          %p263 = pneg %p62
        $region18: #{kfashion_forward.1} parent=11 // pred_check_branch
          %265 = sbr.rel (%p263) target = $region20
        $region19: #{kfashion_forward.1} parent=11 // pred_region
          _
        $region20: #{kfashion_forward.1} parent=11 // pred_fallthru
          _
        // Predicated region
        $region21: #{kfashion_forward.1} parent=11 // pred_check
          %p266 = pneg %p83
        $region22: #{kfashion_forward.1} parent=11 // pred_check_branch
          %268 = sbr.rel (%p266) target = $region24
        $region23: #{kfashion_forward.1} parent=11 // pred_region
          _
        $region24: #{kfashion_forward.1} parent=11 // pred_fallthru
          _
        // Predicated region
        $region25: #{kfashion_forward.1} parent=11 // pred_check
          %p269 = pneg %p104
        $region26: #{kfashion_forward.1} parent=11 // pred_check_branch
          %271 = sbr.rel (%p269) target = $region28
        $region27: #{kfashion_forward.1} parent=11 // pred_region
          _
        $region28: #{kfashion_forward.1} parent=11 // pred_fallthru
          _
        // Predicated region
        $region29: #{kfashion_forward.1} parent=11 // pred_check
          %p272 = pneg %p125
        $region30: #{kfashion_forward.1} parent=11 // pred_check_branch
          %274 = sbr.rel (%p272) target = $region32
        $region31: #{kfashion_forward.1} parent=11 // pred_region
          _
        $region32: #{kfashion_forward.1} parent=11 // pred_fallthru
          _
        // Predicated region
        $region33: #{kfashion_forward.1} parent=11 // pred_check
          %p275 = pneg %p198
        $region34: #{kfashion_forward.1} parent=11 // pred_check_branch
          %277 = sbr.rel (%p275) target = $region36
        $region35: #{kfashion_forward.1} parent=11 // pred_region
          _
        $region36: #{kfashion_forward.1} parent=11 // pred_fallthru
          _
      $region12: #{kfashion_forward.1} parent=5 // pred_fallthru
        _
      %p278 = scmp.lt.s32.totalorder %s20, 2
      // Predicated region
      $region37: #{kfashion_forward.1} parent=5 // pred_check
        %p279 = pneg %p278
      $region38: #{kfashion_forward.1} parent=5 // pred_check_branch
        %281 = sbr.rel (%p279) target = $region40
      $region39: #{kfashion_forward.1} parent=5 // pred_region
        // Predicated region
        $region41: #{kfashion_forward.1} parent=39 // pred_check
          %p282 = pneg %p145
        $region42: #{kfashion_forward.1} parent=39 // pred_check_branch
          %284 = sbr.rel (%p282) target = $region44
        $region43: #{kfashion_forward.1} parent=39 // pred_region
          %s285 = smul.u32 16, %s20
          %p286 = scmp.lt.s32.totalorder %s285, 31
          %s287 = scalar_select %p286, %s285, 31
          %s288 = smul.addr %s287, 4
          %s289 = scalar_lea.vmem %s5, %s288
          %s290 = smul.u32 16, %s20
        $region44: #{kfashion_forward.1} parent=39 // pred_fallthru
          _
        // Predicated region
        $region45: #{kfashion_forward.1} parent=39 // pred_check
          %p291 = pneg %p171
        $region46: #{kfashion_forward.1} parent=39 // pred_check_branch
          %293 = sbr.rel (%p291) target = $region48
        $region47: #{kfashion_forward.1} parent=39 // pred_region
          %p294 = scmp.lt.s32.totalorder %s20, 1
          %s295 = scalar_select %p294, %s20, 1
          %s296 = scalar_lea.vmem %s6, %s295
        $region48: #{kfashion_forward.1} parent=39 // pred_fallthru
          _
      $region40: #{kfashion_forward.1} parent=5 // pred_fallthru
        _
      %p297 = scmp.le.s32.totalorder 1, %s20
      %p298 = scmp.lt.s32.totalorder %s20, 3
      %p299 = pnand %p297, %p298
      %p300 = pneg %p299
      // Predicated region
      $region49: #{kfashion_forward.1} parent=5 // pred_check
        _
      $region50: #{kfashion_forward.1} parent=5 // pred_check_branch
        %302 = sbr.rel (%p299) target = $region52
      $region51: #{kfashion_forward.1} parent=5 // pred_region
        %s303 = ssub.s32 %s20, 1
        %p304 = pneg %p41
        %p305 = pneg %p38
        %p306 = pneg %p62
        %p307 = pneg %p59
        %p308 = pneg %p83
        %p309 = pneg %p80
        %p310 = pneg %p104
        %p311 = pneg %p101
        %p312 = pneg %p125
        %p313 = pneg %p122
        %s314 = smul.u32 16, %s25
        %p315 = scmp.lt.s32.totalorder %s314, 31
        %s316 = scalar_select %p315, %s314, 31
        %s317 = smul.addr %s316, 4
        %s318 = scalar_lea.vmem %s5, %s317
        %p319 = pneg %p151
        %p320 = pneg %p148
        %p321 = scmp.lt.s32.totalorder %s25, 1
        %s322 = scalar_select %p321, %s25, 1
        %s323 = scalar_lea.vmem %s6, %s322
        %p324 = pneg %p177
        %p325 = pneg %p174
        %p326 = pneg %p198
        %p327 = pneg %p195
        %p328 = pneg %p224
        %p329 = pneg %p221
        %s330 = sand.u32 %s211, 1
        %s331 = scalar_lea.sflag [#allocation7], %s330
        %s332 = sand.u32 %s211, 1
        %s333 = smul.addr %s332, 8
        %s334 = scalar_lea.vmem [#allocation6], %s333
        %p335 = pneg %p245
        %p336 = pneg %p242
        %s337 = smul.u32 16, %s25
        %p338 = scmp.lt.s32.totalorder %s337, 31
        %s339 = scalar_select %p338, %s337, 31
        %s340 = smul.addr %s339, 4
        %s341 = scalar_lea.vmem %s5, %s340
        %s342 = smul.u32 16, %s25
        %p343 = scmp.lt.s32.totalorder %s25, 1
        %s344 = scalar_select %p343, %s25, 1
        %s345 = scalar_lea.vmem %s6, %s344
        %p346 = scmp.eq.s32.totalorder %s25, 0
        // Predicated region
        $region53: #{kfashion_forward.1} parent=51 // pred_check
          %p347 = pneg %p346
        $region54: #{kfashion_forward.1} parent=51 // pred_check_branch
          %349 = sbr.rel (%p347) target = $region56
        $region55: #{kfashion_forward.1} parent=51 // pred_region
          %v350 = vld [vmem:[%s0] sm:$0xff]
          %v351 = vpack.c.bf16 %v350, %v350
          %v352 = vld [vmem:[%s1] sm:$0xf]
          %v353 = vld [vmem:[%s1 + $0x4] sm:$0xf]
          %v354 = vld [vmem:[%s1 + $0x8] sm:$0xf]
          %v355 = vld [vmem:[%s1 + $0xc] sm:$0xf]
          %v356 = vld [vmem:[%s1 + $0x10] sm:$0xf]
          %v357 = vld [vmem:[%s1 + $0x14] sm:$0xf]
          %v358 = vld [vmem:[%s1 + $0x18] sm:$0xf]
          %v359 = vld [vmem:[%s1 + $0x1c] sm:$0xf]
          %v360 = vld [vmem:[%s1 + $0x20] sm:$0xf]
          %v361 = vld [vmem:[%s1 + $0x24] sm:$0xf]
          %v362 = vld [vmem:[%s1 + $0x28] sm:$0xf]
          %v363 = vld [vmem:[%s1 + $0x2c] sm:$0xf]
          %v364 = vld [vmem:[%s1 + $0x30] sm:$0xf]
          %v365 = vld [vmem:[%s1 + $0x34] sm:$0xf]
          %v366 = vld [vmem:[%s1 + $0x38] sm:$0xf]
          %v367 = vld [vmem:[%s1 + $0x3c] sm:$0xf]
          %v368 = vld [vmem:[%s2] sm:$0x1]
          %v370 = vperm.slane %v368, 0
          %v388 = vunpack.c.l.b16 %v352
          %v389 = vunpack.c.l.b16 %v353
          %v390 = vunpack.c.l.b16 %v354
          %v391 = vunpack.c.l.b16 %v355
          %v392 = vunpack.c.l.b16 %v356
          %v393 = vunpack.c.l.b16 %v357
          %v394 = vunpack.c.l.b16 %v358
          %v395 = vunpack.c.l.b16 %v359
          %v396 = vunpack.c.l.b16 %v360
          %v397 = vunpack.c.l.b16 %v361
          %v398 = vunpack.c.l.b16 %v362
          %v399 = vunpack.c.l.b16 %v363
          %v400 = vunpack.c.l.b16 %v364
          %v401 = vunpack.c.l.b16 %v365
          %v402 = vunpack.c.l.b16 %v366
          %v403 = vunpack.c.l.b16 %v367
          %v404 = vpack.c.b16 %v389, %v388
          %v405 = vpack.c.b16 %v391, %v390
          %v406 = vpack.c.b16 %v393, %v392
          %v407 = vpack.c.b16 %v395, %v394
          %v408 = vpack.c.b16 %v397, %v396
          %v409 = vpack.c.b16 %v399, %v398
          %v410 = vpack.c.b16 %v401, %v400
          %v411 = vpack.c.b16 %v403, %v402
          %420 = vmatpush.bf16.msra.mxu0 %v411
          %421 = vmatpush.bf16.msra.mxu0 %v410
          %422 = vmatpush.bf16.msra.mxu0 %v409
          %423 = vmatpush.bf16.msra.mxu0 %v408
          %424 = vmatpush.bf16.msra.mxu0 %v407
          %425 = vmatpush.bf16.msra.mxu0 %v406
          %426 = vmatpush.bf16.msra.mxu0 %v405
          %427 = vmatpush.bf16.msra.mxu0 %v404
          %428 = vmatmul.bf16.gmra.mxu0 %v351
          %v429 = vpop.f32.mrf.mxu0
          %v430 = vadd.f32 %v370, %v429
          %v431 = vpop.f32.mrf.mxu0
          %432 = vdwg.mxu0
          %v433 = vrot.slane %v430, 4
          %v434 = vadd.f32 %v430, %v433
          %v435 = vrot.slane %v434, 2
          %v436 = vadd.f32 %v434, %v435
          %v437 = vrot.slane %v436, 1
          %v438 = vadd.f32 %v436, %v437
          %v439 = vrcp.pop 8.0
          %v440 = vmul.f32 8.0, %v439
          %v441 = vsub.f32 1.0, %v440
          %v442 = vmul.f32 %v439, %v441
          %v443 = vadd.f32 %v439, %v442
          %vm444 = vweird.f32 %v439
          %v445 = vsel %vm444, %v439, %v443
          %v446 = vmul.f32 %v438, %v445
          %v447 = vsub.f32 %v430, %v446
          %v448 = vmul.f32 %v447, %v447
          %v449 = vrot.slane %v448, 4
          %v450 = vadd.f32 %v448, %v449
          %v451 = vrot.slane %v450, 2
          %v452 = vadd.f32 %v450, %v451
          %v453 = vrot.slane %v452, 1
          %v454 = vadd.f32 %v452, %v453
          %v455 = vmul.f32 %v454, %v445
          %v456 = vld [vmem:[%s3] sm:$0x1]
          %v457 = vadd.f32 %v455, 1e-05
          %v458 = vrsqrt.pop %v457
          %v459 = vmul.f32 %v458, %v457
          %v460 = vmul.f32 %v459, %v458
          %v461 = vmul.f32 0.5, %v460
          %v462 = vsub.f32 1.5, %v461
          %v463 = vmul.f32 %v458, %v462
          %vm464 = vweird.f32 %v457
          %vm465 = vweird.f32 %v458
          %vm466 = vmor %vm464, %vm465
          %v467 = vsel %vm466, %v458, %v463
          %v468 = vmul.f32 %v456, %v467
          %v470 = vperm.slane %v468, 0
          %v472 = vmul.f32 %v447, %v470
          %v473 = vld [vmem:[%s4] sm:$0x1]
          %v475 = vperm.slane %v473, 0
          %v477 = vadd.f32 %v472, %v475
          %v478 = vmul.f32 %v477, %v477
          %479 = vadd.xlane.f32.xlu0 %v478
          %v480 = vpop.xlane.xlu0 %479
          %v481 = vmax.f32 %v480, 1e-24
          %v482 = vrsqrt.pop %v481
          %v483 = vmul.f32 %v482, %v481
          %v484 = vmul.f32 %v483, %v482
          %v485 = vmul.f32 0.5, %v484
          %v486 = vsub.f32 1.5, %v485
          %v487 = vmul.f32 %v482, %v486
          %vm488 = vweird.f32 %v481
          %vm489 = vweird.f32 %v482
          %vm490 = vmor %vm488, %vm489
          %v491 = vsel %vm490, %v482, %v487
          %v492 = vmul.f32 %v477, %v491
          %v493 = vpack.c.bf16 %v492, %v492
          %494 = vst [vmem:[#allocation2] sm:$0xf] %v493
          %vm495 = vcmask 7168
          %496 = vst.msk [vmem:[#allocation3] sm:$0xff] %vm495, -1e+30
          %497 = vst.msk [vmem:[#allocation4] sm:$0xff] %vm495, 0.0
          %498 = vst.msk [vmem:[#allocation5] sm:$0xff] %vm495, 0.0
        $region56: #{kfashion_forward.1} parent=51 // pred_fallthru
          _
        %v499 = vld [vmem:[#allocation2] sm:$0xf]
        %v500 = vld [vmem:[%s341] sm:$0xf]
        %v501 = vld [vmem:[%s341 + $0x4] sm:$0xf]
        %v502 = vld [vmem:[%s341 + $0x8] sm:$0xf]
        %v503 = vld [vmem:[%s341 + $0xc] sm:$0xf]
        %v504 = vld [vmem:[%s341 + $0x10] sm:$0xf]
        %v505 = vld [vmem:[%s341 + $0x14] sm:$0xf]
        %v506 = vld [vmem:[%s341 + $0x18] sm:$0xf]
        %v507 = vld [vmem:[%s341 + $0x1c] sm:$0xf]
        %v508 = vld [vmem:[%s341 + $0x20] sm:$0xf]
        %v509 = vld [vmem:[%s341 + $0x24] sm:$0xf]
        %v510 = vld [vmem:[%s341 + $0x28] sm:$0xf]
        %v511 = vld [vmem:[%s341 + $0x2c] sm:$0xf]
        %v512 = vld [vmem:[%s341 + $0x30] sm:$0xf]
        %v513 = vld [vmem:[%s341 + $0x34] sm:$0xf]
        %v514 = vld [vmem:[%s341 + $0x38] sm:$0xf]
        %v515 = vld [vmem:[%s341 + $0x3c] sm:$0xf]
        %v532 = vunpack.c.l.b16 %v500
        %v533 = vunpack.c.l.b16 %v501
        %v534 = vunpack.c.l.b16 %v502
        %v535 = vunpack.c.l.b16 %v503
        %v536 = vunpack.c.l.b16 %v504
        %v537 = vunpack.c.l.b16 %v505
        %v538 = vunpack.c.l.b16 %v506
        %v539 = vunpack.c.l.b16 %v507
        %v540 = vunpack.c.l.b16 %v508
        %v541 = vunpack.c.l.b16 %v509
        %v542 = vunpack.c.l.b16 %v510
        %v543 = vunpack.c.l.b16 %v511
        %v544 = vunpack.c.l.b16 %v512
        %v545 = vunpack.c.l.b16 %v513
        %v546 = vunpack.c.l.b16 %v514
        %v547 = vunpack.c.l.b16 %v515
        %v548 = vpack.c.b16 %v533, %v532
        %v549 = vpack.c.b16 %v535, %v534
        %v550 = vpack.c.b16 %v537, %v536
        %v551 = vpack.c.b16 %v539, %v538
        %v552 = vpack.c.b16 %v541, %v540
        %v553 = vpack.c.b16 %v543, %v542
        %v554 = vpack.c.b16 %v545, %v544
        %v555 = vpack.c.b16 %v547, %v546
        %564 = vmatpush.bf16.xpose.msra.mxu0 %v555
        %565 = vmatpush.bf16.xpose.msra.mxu0 %v554
        %566 = vmatpush.bf16.xpose.msra.mxu0 %v553
        %567 = vmatpush.bf16.xpose.msra.mxu0 %v552
        %568 = vmatpush.bf16.xpose.msra.mxu0 %v551
        %569 = vmatpush.bf16.xpose.msra.mxu0 %v550
        %570 = vmatpush.bf16.xpose.msra.mxu0 %v549
        %571 = vmatpush.bf16.xpose.msra.mxu0 %v548
        %572 = vmatmul.bf16.gmra.mxu0 %v499
        %v573 = vpop.f32.mrf.mxu0
        %v574 = vadd.f32 0.0, %v573
        %v575 = vpop.f32.mrf.mxu0
        %576 = vdwg.mxu0
        %v577 = vld [vmem:[%s345] sm:$0x1]
        %v579 = vperm.slane %v577, 0
        %v581 = vmul.f32 %v574, %v579
        %v582 = vmax.f32 %v581, -1.0
        %v583 = vmin.f32 %v582, 1.0
        %s584 = smul.u32 %s25, 128
        %v585 = vlaneseq
        %v586 = vand.u32 %v585, 127
        %v587 = vstv %s584
        %v588 = vadd.s32 %v587, %v586
        %v589 = vld [vmem:[%s7] sm:$0xff]
        %590 = vset.pattern.permute.xlu0 0
        %591 = vperm.xlu0 %590, %v589
        %v592 = vpop.permute.xlu0 %591
        %vm593 = vcmp.eq.s32.totalorder %v588, %v592
        %v594 = vsel %vm593, 1, 0
        %v595 = vcvt.s32.f32 %v594
        %v596 = vmul.f32 %v595, %v583
        %597 = vadd.xlane.f32.xlu0 %v596
        %v598 = vpop.xlane.xlu0 %597
        %v599 = vmul.f32 %v598, %v598
        %v600 = vsub.f32 1.0, %v599
        %v601 = vmax.f32 %v600, 0.0
        %v602 = vrsqrt.pop %v601
        %v603 = vmul.f32 %v602, %v601
        %v604 = vmul.f32 %v603, %v602
        %v605 = vmul.f32 0.5, %v604
        %v606 = vsub.f32 1.5, %v605
        %v607 = vmul.f32 %v602, %v606
        %v608 = vmul.f32 %v601, %v607
        %vm609 = vcmp.eq.f32.partialorder %v601, inf
        %v610 = vsel %vm609, %v601, %v608
        %vm611 = vcmp.eq.f32.partialorder %v601, 0.0
        %v612 = vand.u32 %v601, 2147483648
        %v613 = vsel %vm611, %v612, %v610
        %v614 = vmul.f32 %v598, 0.87758255
        %v615 = vmul.f32 %v613, 0.47942555
        %v616 = vsub.f32 %v614, %v615
        %vm617 = vcmp.gt.f32.partialorder %v598, -0.87758255
        %v618 = vsub.f32 %v598, 0.23971277
        %v619 = vsel %vm617, %v616, %v618
        %v620 = vmul.f32 %v583, 30.0
        %v621 = vsub.f32 %v619, %v598
        %v622 = vmul.f32 %v621, 30.0
        %v623 = vmul.f32 %v595, %v622
        %v624 = vadd.f32 %v620, %v623
        %625 = vst [vmem:[%s334] sm:$0xff] %v624
        %vm626 = vcmp.lt.s32.totalorder %v588, 200
        %v627 = vsel %vm626, %v624, -1e+30
        %v628 = vld [vmem:[#allocation3] sm:$0xff]
        %629 = vmax.xlane.f32.xlu0 %v627
        %v630 = vpop.xlane.xlu0 %629
        %v631 = vmax.f32 %v628, %v630
        %v632 = vsub.f32 %v628, %v631
        %v633 = vmul.f32 %v632, 1.442695
        %v634 = vpow.pop %v633
        %v635 = vld [vmem:[#allocation4] sm:$0xff]
        %v636 = vmul.f32 %v634, %v635
        %638 = vset.pattern.permute.xlu0 0
        %639 = vperm.xlu0 %638, %v631
        %v640 = vpop.permute.xlu0 %639
        %v642 = vsub.f32 %v627, %v640
        %v643 = vmul.f32 %v642, 1.442695
        %v644 = vpow.pop %v643
        %645 = vadd.xlane.f32.xlu0 %v644
        %v646 = vpop.xlane.xlu0 %645
        %v647 = vadd.f32 %v636, %v646
        %vm648 = vcmask 7168
        %649 = vst.msk [vmem:[#allocation4] sm:$0xff] %vm648, %v647
        %650 = vst.msk [vmem:[#allocation3] sm:$0xff] %vm648, %v631
        %v651 = vld [vmem:[#allocation5] sm:$0xff]
        %v652 = vmul.f32 %v595, %v624
        %653 = vadd.xlane.f32.xlu0 %v652
        %v654 = vpop.xlane.xlu0 %653
        %v655 = vadd.f32 %v651, %v654
        %656 = vst.msk [vmem:[#allocation5] sm:$0xff] %vm648, %v655
        %p657 = scmp.eq.s32.totalorder %s25, 1
        // Predicated region
        $region57: #{kfashion_forward.1} parent=51 // pred_check
          %p658 = pneg %p657
        $region58: #{kfashion_forward.1} parent=51 // pred_check_branch
          %660 = sbr.rel (%p658) target = $region60
        $region59: #{kfashion_forward.1} parent=51 // pred_region
          %v661 = vld [vmem:[#allocation3] sm:$0xff]
          %v662 = vld [vmem:[#allocation4] sm:$0xff]
          %v663 = vlog2.pop %v662
          %v664 = vmul.f32 %v663, 0.6931472
          %v665 = vadd.f32 %v661, %v664
          %v666 = vld [vmem:[#allocation5] sm:$0xff]
          %v667 = vsub.f32 %v665, %v666
          %v668 = vsel %vm648, %v667, 0.0
          %669 = vadd.xlane.f32.xlu0 %v668
          %v670 = vpop.xlane.xlu0 %669
          %v671 = vrot.slane %v670, 4
          %v672 = vadd.f32 %v670, %v671
          %v673 = vrot.slane %v672, 2
          %v674 = vadd.f32 %v672, %v673
          %v675 = vrot.slane %v674, 1
          %v676 = vadd.f32 %v674, %v675
          %s677 = vtos %v676
          %v678 = vrcp.pop 8.0
          %v679 = vmul.f32 8.0, %v678
          %v680 = vsub.f32 1.0, %v679
          %v681 = vmul.f32 %v678, %v680
          %v682 = vadd.f32 %v678, %v681
          %vm683 = vweird.f32 %v678
          %v684 = vsel %vm683, %v678, %v682
          %s685 = vtos %v684
          %s686 = smul.f32 %s677, %s685
          %s687 = scalar_lea.smem [#allocation9], 0
          %688 = sst [smem:[%s687]] %s686
        $region60: #{kfashion_forward.1} parent=51 // pred_fallthru
          _
        %s689 = sand.u32 %s211, 1
        %s690 = scalar_lea.sflag [#allocation7], %s689
        %s691 = sand.u32 %s211, 1
        %s692 = smul.addr %s691, 8
        %s693 = scalar_lea.vmem [#allocation6], %s692
        // Predicated region
        $region61: #{kfashion_forward.1} parent=51 // pred_check
          %p694 = pneg %p221
        $region62: #{kfashion_forward.1} parent=51 // pred_check_branch
          %696 = sbr.rel (%p694) target = $region64
        $region63: #{kfashion_forward.1} parent=51 // pred_region
          %698 = vsyncadd %s690, 0
          %s699 = smul.addr %s25, 8
          %s700 = scalar_lea.hbm %s8, %s699
          %s702 = sshll.u32 %s693, 4
          %s703 = int_to_ptr.vmem [resolvable:$true] %s702
          %s704 = sshll.u32 %s700, 4
          %s705 = int_to_ptr.hbm [resolvable:$true] %s704
          %707 = dma.vmem_to_hbm [thread:$0]  %s703, 128, %s705, %s690
        $region64: #{kfashion_forward.1} parent=51 // pred_fallthru
          _
        // Predicated region
        $region65: #{kfashion_forward.1} parent=51 // pred_check
          %p708 = pneg %p242
        $region66: #{kfashion_forward.1} parent=51 // pred_check_branch
          %710 = sbr.rel (%p708) target = $region68
        $region67: #{kfashion_forward.1} parent=51 // pred_region
          %712 = vsyncadd [#allocation8], 0
          %s714 = sshll.u32 %s9, 4
          %s715 = int_to_ptr.hbm [resolvable:$true] %s714
          %717 = dma.smem_to_hbm [#allocation9], 16, %s715, [#allocation8]
        $region68: #{kfashion_forward.1} parent=51 // pred_fallthru
          _
        // Predicated region
        $region69: #{kfashion_forward.1} parent=51 // pred_check
          %p718 = pneg %p242
        $region70: #{kfashion_forward.1} parent=51 // pred_check_branch
          %720 = sbr.rel (%p718) target = $region72
        $region71: #{kfashion_forward.1} parent=51 // pred_region
          %722 = dma.done [#allocation8], 16
        $region72: #{kfashion_forward.1} parent=51 // pred_fallthru
          _
        %723 = sfence
      $region52: #{kfashion_forward.1} parent=5 // pred_fallthru
        _
      %p724 = scmp.le.s32.totalorder 2, %s20
      // Predicated region
      $region73: #{kfashion_forward.1} parent=5 // pred_check
        %p725 = pneg %p724
      $region74: #{kfashion_forward.1} parent=5 // pred_check_branch
        %727 = sbr.rel (%p725) target = $region76
      $region75: #{kfashion_forward.1} parent=5 // pred_region
        %s728 = ssub.s32 %s20, 2
        // Predicated region
        $region77: #{kfashion_forward.1} parent=75 // pred_check
          %p729 = pneg %p227
        $region78: #{kfashion_forward.1} parent=75 // pred_check_branch
          %731 = sbr.rel (%p729) target = $region80
        $region79: #{kfashion_forward.1} parent=75 // pred_region
          %s732 = sand.u32 %s212, 1
          %s733 = scalar_lea.sflag [#allocation7], %s732
          %s734 = sand.u32 %s212, 1
          %s735 = smul.addr %s734, 8
          %s736 = scalar_lea.vmem [#allocation6], %s735
          %738 = dma.done %s733, 128
        $region80: #{kfashion_forward.1} parent=75 // pred_fallthru
          _
      $region76: #{kfashion_forward.1} parent=5 // pred_fallthru
        _
    $region6: #{kfashion_forward.1} parent=1 // loop_footer
      %s24 = sadd.s32 1, %s20
    $region7: #{kfashion_forward.1} parent=1 // loop_footer_branch
      %19 = sbr.rel target = $region3
    $region8: #{kfashion_forward.1} parent=1 // loop_exit
      _
    %739 = vsyncpa [#allocation7], 1
    %s740 = scalar_lea.sflag [#allocation7], 1
    %741 = vsyncpa %s740, 1
    %742 = vsyncpa [#allocation8], 1
    %s743 = scalar_lea.sflag [#allocation8], 1
    %744 = vsyncpa %s743, 1

</llo_original>
